<compile_context>
chip_gen: v7x
topology: tpu7x:2x2x1
jax: 0.10.0
libtpu: 0.0.40
codegen_flags: <defaults>
</compile_context>

<pallas_src>
import functools

import jax
import jax.numpy as jnp
from jax.experimental import pallas as pl
from jax.experimental.pallas import tpu as pltpu

VMEM_SPEC = pl.BlockSpec(memory_space=pltpu.MemorySpace.VMEM)
NEG_INF = -1e9


def _round_up(x, m):
    return ((x + m - 1) // m) * m


def _pow2_floor(x):
    p = 8
    while p * 2 <= x:
        p *= 2
    return p


def _tpu_vmem_bytes():
    try:
        return int(pltpu.get_tpu_info().vmem_capacity_bytes)
    except Exception:
        return 64 << 20            # conservative: v7x physical VMEM per TC


def pick_tiles(n, vmem_bytes):
    """(row_tile, col_tile, padded_N) for the attention kernel.

    Working-set model per grid step: ~3x bf16 bias tile (Buffered(3)) +
    ~2.5x f32 [TR,TC] temps (scores, p, bf16 p copy) ~= 18 B / element, plus
    small xw / accumulator terms.  Budget <= vmem/6 keeps double-buffered
    inputs + temps well inside v7x's 64 MiB and v5e's scoped limits.
    """
    budget = max(2 << 20, min(vmem_bytes // 6, 12 << 20))
    n128 = _round_up(max(n, 1), 128)
    tc = 128
    for cand in (512, 256):
        if n128 % cand == 0 or n128 >= 4 * cand:
            tc = cand
            break
    tc = min(tc, n128)
    n_pad = _round_up(n128, tc)
    tr = budget // (18 * tc)
    tr = max(8, min(512, _pow2_floor(max(tr, 8))))
    tr = min(tr, n_pad)
    while n_pad % tr != 0:
        tr //= 2
    if (n_pad // tr) % 2 == 1 and tr >= 16:
        tr //= 2                   # even row-tile count: megacore balance (heads==1)
    return tr, tc, n_pad


def _maybe_buffered(block_shape, index_map, depth=3):
    """BlockSpec with N-deep buffering when the jax version supports it."""
    buffered = getattr(pl, "Buffered", None)
    if buffered is not None:
        try:
            return pl.BlockSpec(block_shape, index_map, pipeline_mode=buffered(depth))
        except TypeError:
            pass
    return pl.BlockSpec(block_shape, index_map)


# ----------------------------------------------------------------------------
# Pallas kernels
# ----------------------------------------------------------------------------
def _project_kernel(h_ref, w_ref, xw_ref, alpha_ref, *, heads_out, c_out):
    """Row tile of the fused projection.

    h_ref:  [H_in, TR, C_in]  head-major previous-layer activations
    w_ref:  [H_in, C_in, H_out*C_out + 2*H_out]  = [W | W @ A] per input head
            (A block-diagonal att_src|att_dst), so one MXU pass yields both
            xw and the per-node (a_src, a_dst) scalars.
    Outputs the head-major xw (bf16, MXU operand for attention) directly and
    the [TR, 2*H_out] alpha slab -- no XLA transpose of the activation.
    """
    heads_in = h_ref.shape[0]
    acc = jnp.zeros((h_ref.shape[1], w_ref.shape[2]), jnp.float32)
    for hi in range(heads_in):                       # static head loop
        acc = acc + jnp.dot(h_ref[hi], w_ref[hi],
                            preferred_element_type=jnp.float32)
    for ho in range(heads_out):                      # per-head slab, no concat
        xw_ref[ho] = acc[:, ho * c_out:(ho + 1) * c_out].astype(xw_ref.dtype)
    alpha_ref[...] = acc[:, heads_out * c_out:]


def _gat_attn_kernel(xw_ref, asrc_ref, adst_ref, bias_ref, lbias_ref, o_ref,
                     m_sc, l_sc, acc_sc, *, act_slope):
    """One (head, dst-row-tile, src-col-tile) step of online-softmax GAT attention.

    scores[i, j] = leaky_relu(a_dst[i] + a_src[j] + bias[i, j], 0.2), where
    `bias` (bf16 in HBM) carries the per-edge attention term on edges and
    -1e9 on non-edges.  Masked entries underflow to exactly 0 in the softmax,
    and any "all-masked" column tile is killed by the online rescaling factor
    exp(m_old - m_new) == 0 once a real (self-loop) entry is seen, so the
    result matches PyG's mask-after-leaky-relu edge softmax.
    """
    k = pl.program_id(2)

    @pl.when(k == 0)
    def _():
        m_sc[...] = jnp.full_like(m_sc, -jnp.inf)
        l_sc[...] = jnp.zeros_like(l_sc)
        acc_sc[...] = jnp.zeros_like(acc_sc)

    xw_h = xw_ref[0]                                  # [TC, C] bf16 (V operand)
    a_src = asrc_ref[0]                               # [1, TC]
    a_dst = adst_ref[0]                               # [TR, 1]
    bias = bias_ref[0].astype(jnp.float32)            # [TR, TC] bf16 -> f32

    scores = a_dst + a_src + bias
    scores = jnp.maximum(scores, 0.2 * scores)        # GAT negative_slope = 0.2
    m_new = jnp.maximum(m_sc[...], jnp.max(scores, axis=-1, keepdims=True))
    corr = jnp.exp(m_sc[...] - m_new)
    p = jnp.exp(scores - m_new)
    l_sc[...] = corr * l_sc[...] + jnp.sum(p, axis=-1, keepdims=True)
    acc_sc[...] = corr * acc_sc[...] + jnp.dot(
        p.astype(jnp.bfloat16), xw_h, preferred_element_type=jnp.float32)
    m_sc[...] = m_new

    @pl.when(k == pl.num_programs(2) - 1)
    def _():
        # normalize AFTER the MXU dot: one [TR, C] multiply, EUP reciprocal
        out = acc_sc[...] * pl.reciprocal(l_sc[...], approx=True) + lbias_ref[0]
        if act_slope is not None:                     # activation between convs
            out = jnp.maximum(out, act_slope * out)
        o_ref[0] = out.astype(o_ref.dtype)


def _head_kernel(*refs, n_lin, act_slope):
    """Fused global pool + linear stack + task head (dropout = identity, eval)."""
    o_ref = refs[-1]
    pool = refs[0][...]
    h = refs[1][...]
    g = jnp.dot(pool, h, preferred_element_type=jnp.float32)
    idx = 2
    for _ in range(n_lin):
        w = refs[idx][...]
        b = refs[idx + 1][...]
        idx += 2
        g = jnp.dot(g, w, preferred_element_type=jnp.float32) + b
        g = jnp.maximum(g, act_slope * g)
    w = refs[idx][...]
    b = refs[idx + 1][...]
    o_ref[...] = (jnp.dot(g, w, preferred_element_type=jnp.float32) + b
                  ).astype(o_ref.dtype)


# ----------------------------------------------------------------------------
# Layer wrapper
# ----------------------------------------------------------------------------
def _block_diag(att):
    """[H, C] -> [H*C, H] block diagonal so xw @ A == per-head dot(xw_h, att_h)."""
    h, c = att.shape
    eye = jnp.eye(h, dtype=att.dtype)
    return (att[:, :, None] * eye[:, None, :]).reshape(h * c, h)


def gat_conv_layer(h_heads, cp, bias_he, *, n_pad, tr, tc, act_slope, vmem_limit):
    heads_in, _, c_in = h_heads.shape
    heads = cp["heads"]
    hc = cp["w"].shape[1]
    c = hc // heads
    n_row = n_pad // tr
    n_col = n_pad // tc

    # fold attention vectors into the weight matmul: one lane-dense MXU output
    a_att = jnp.concatenate(
        [_block_diag(cp["att_src"]), _block_diag(cp["att_dst"])], axis=1)  # [HC, 2H]
    w_cat = jnp.concatenate([cp["w"], cp["w"] @ a_att], axis=1)            # [Fin, HC+2H]
    w_cat = w_cat.reshape(heads_in, c_in, hc + 2 * heads)

    xw_heads, alpha = pl.pallas_call(
        functools.partial(_project_kernel, heads_out=heads, c_out=c),
        out_shape=(jax.ShapeDtypeStruct((heads, n_pad, c), jnp.bfloat16),
                   jax.ShapeDtypeStruct((n_pad, 2 * heads), jnp.float32)),
        grid=(n_row,),
        in_specs=[pl.BlockSpec((heads_in, tr, c_in), lambda r: (0, r, 0)),
                  pl.BlockSpec((heads_in, c_in, hc + 2 * heads), lambda r: (0, 0, 0))],
        out_specs=(pl.BlockSpec((heads, tr, c), lambda r: (0, r, 0)),
                   pl.BlockSpec((tr, 2 * heads), lambda r: (r, 0))),
        compiler_params=pltpu.CompilerParams(dimension_semantics=("parallel",)),
    )(h_heads, w_cat)

    # tiny [N, 2H] layout glue so the attention kernel never transposes on the hot path
    a_src_row = alpha[:, :heads].T.reshape(heads, 1, n_pad)     # [H, 1, N]
    a_dst_col = alpha[:, heads:].T.reshape(heads, n_pad, 1)     # [H, N, 1]
    l_bias = cp["bias"].reshape(heads, 1, c)                    # [H, 1, C]

    # attention: grid (head, dst-row-tile, src-col-tile), online softmax over cols
    out_heads = pl.pallas_call(
        functools.partial(_gat_attn_kernel, act_slope=act_slope),
        out_shape=jax.ShapeDtypeStruct((heads, n_pad, c), jnp.float32),
        grid=(heads, n_row, n_col),
        in_specs=[
            pl.BlockSpec((1, tc, c), lambda hh, r, k: (hh, k, 0)),    # xw col tile (V)
            pl.BlockSpec((1, 1, tc), lambda hh, r, k: (hh, 0, k)),    # a_src col tile
            pl.BlockSpec((1, tr, 1), lambda hh, r, k: (hh, r, 0)),    # a_dst row tile
            _maybe_buffered((1, tr, tc), lambda hh, r, k: (hh, r, k)),  # bf16 bias tile
            pl.BlockSpec((1, 1, c), lambda hh, r, k: (hh, 0, 0)),     # layer bias
        ],
        out_specs=pl.BlockSpec((1, tr, c), lambda hh, r, k: (hh, r, 0)),
        scratch_shapes=[pltpu.VMEM((tr, 1), jnp.float32),   # running max
                        pltpu.VMEM((tr, 1), jnp.float32),   # running sum
                        pltpu.VMEM((tr, c), jnp.float32)],  # accumulator
        compiler_params=pltpu.CompilerParams(
            dimension_semantics=("parallel", "parallel", "arbitrary"),
            vmem_limit_bytes=vmem_limit),
    )(xw_heads, a_src_row, a_dst_col, bias_he, l_bias)
    return out_heads                                   # [H, N, C] head-major


# ----------------------------------------------------------------------------
# Parameter construction (deterministic, synthetic)
# ----------------------------------------------------------------------------
def _uniform(key, shape, scale):
    return jax.random.uniform(key, shape, jnp.float32, -scale, scale)


def init_params(key, cfg):
    F = cfg["num_node_features"]
    Fe = cfg["num_edge_features"]
    H = cfg["n_heads"]
    C = cfg["n_conv_hidden"]
    params = {"convs": [], "lin": [], "out": []}

    in_ch = F
    for li in range(cfg["n_conv"]):
        heads = 1 if li == cfg["n_conv"] - 1 else H
        key, k1, k2, k3, k4, k5 = jax.random.split(key, 6)
        params["convs"].append({
            "heads": heads,
            "w": _uniform(k1, (in_ch, heads * C), 0.3),
            "w_edge": _uniform(k2, (Fe, heads * C), 0.3),
            "att_src": _uniform(k3, (heads, C), 0.3),
            "att_dst": _uniform(k4, (heads, C), 0.3),
            "att_edge": _uniform(k5, (heads, C), 0.3),
            "bias": jnp.zeros((heads * C,), jnp.float32) + 0.01,
        })
        in_ch = heads * C

    lin_in = C
    for _ in range(cfg["n_lin"]):
        key, k1, k2 = jax.random.split(key, 3)
        params["lin"].append({
            "w": _uniform(k1, (lin_in, cfg["n_lin_hidden"]), 0.2),
            "b": _uniform(k2, (cfg["n_lin_hidden"],), 0.1),
        })
        lin_in = cfg["n_lin_hidden"]

    head_in = cfg["n_lin_hidden"] if cfg["n_lin"] > 0 else C
    for n_class in cfg["n_classes"]:
        key, k1, k2 = jax.random.split(key, 3)
        params["out"].append({
            "w": _uniform(k1, (head_in, n_class), 0.2),
            "b": _uniform(k2, (n_class,), 0.1),
        })
    return params


# ----------------------------------------------------------------------------
# Forward pass (Pallas kernels + small JAX glue for graph scatter / layout)
# ----------------------------------------------------------------------------
def gat_forward(params, x, edge_src, edge_dst, edge_attr, batch, task_id, cfg):
    N = x.shape[0]
    C = cfg["n_conv_hidden"]
    B = cfg["n_graphs"]
    Fe = cfg["num_edge_features"]
    vmem = _tpu_vmem_bytes()
    tr, tc, n_pad = pick_tiles(N, vmem)
    vmem_limit = min(int(vmem * 3 // 4), 112 << 20)

    # --- add self loops, fill_value='mean' (mean of incoming edge_attr) ------
    ones = jnp.ones_like(edge_dst, dtype=jnp.float32)
    deg = jax.ops.segment_sum(ones, edge_dst, num_segments=N)
    loop_attr = jax.ops.segment_sum(edge_attr, edge_dst, num_segments=N)
    loop_attr = loop_attr / jnp.maximum(deg, 1.0)[:, None]
    src_full = jnp.concatenate([edge_src, jnp.arange(N, dtype=edge_src.dtype)])
    dst_full = jnp.concatenate([edge_dst, jnp.arange(N, dtype=edge_dst.dtype)])
    ea_full = jnp.concatenate([edge_attr, loop_attr], axis=0)

    h = jnp.pad(x, ((0, n_pad - N), (0, 0)))[None]      # [1, n_pad, F] head-major
    n_layers = len(params["convs"])
    for li, cp in enumerate(params["convs"]):
        heads = cp["heads"]
        # per-edge attention term: fold W_edge with att_edge -> tiny [E', H] matmul
        w_edge_alpha = (cp["w_edge"].reshape(Fe, heads, C)
                        * cp["att_edge"][None, :, :]).sum(-1)            # [Fe, H]
        alpha_edge = ea_full @ w_edge_alpha                              # [E', H]
        # dense per-head bf16 bias: edge alpha on edges, -1e9 (softmax mask) elsewhere.
        # TODO(synk): replace the dense [H, N, N] bias with CSR edge lists via
        # scalar prefetch so HBM traffic scales with E instead of N^2 on sparse graphs.
        # TODO(synk): duplicate (dst, src) edges overwrite instead of forming
        # separate softmax entries (same limitation as PyG-dense baselines).
        bias_he = jnp.full((heads, n_pad, n_pad), NEG_INF, jnp.bfloat16)
        bias_he = bias_he.at[:, dst_full, src_full].set(
            alpha_edge.T.astype(jnp.bfloat16))
        if n_pad > N:
            pad_ids = jnp.arange(N, n_pad)
            bias_he = bias_he.at[:, pad_ids, pad_ids].set(0.0)  # keep pad rows finite

        act = 0.01 if li < n_layers - 1 else None    # F.leaky_relu between convs
        h = gat_conv_layer(h, cp, bias_he, n_pad=n_pad, tr=tr, tc=tc,
                           act_slope=act, vmem_limit=vmem_limit)

    # last conv layer has heads == 1 -> [n_pad, C]; transpose is trivial/general
    h_nodes = jnp.transpose(h, (1, 0, 2)).reshape(n_pad, -1)

    # --- fused global pool + lin stack + task head ----------------------------
    if n_pad > N:
        batch_pad = jnp.concatenate([batch, jnp.full((n_pad - N,), -1, batch.dtype)])
    else:
        batch_pad = batch
    pool_mat = (batch_pad[None, :] == jnp.arange(B)[:, None]).astype(jnp.float32)
    if cfg["pool"] == "mean":
        pool_mat = pool_mat / jnp.maximum(pool_mat.sum(-1, keepdims=True), 1.0)

    # TODO(synk): dropout layers are identity in eval/inference mode.
    op = params["out"][task_id]
    args = [pool_mat, h_nodes]
    for lp in params["lin"]:
        args += [lp["w"], lp["b"].reshape(1, -1)]
    args += [op["w"], op["b"].reshape(1, -1)]
    return pl.pallas_call(
        functools.partial(_head_kernel, n_lin=len(params["lin"]), act_slope=0.01),
        out_shape=jax.ShapeDtypeStruct((B, op["w"].shape[1]), jnp.float32),
        in_specs=[VMEM_SPEC] * len(args),
        out_specs=VMEM_SPEC,
    )(*args)


# ----------------------------------------------------------------------------
# Pure-JAX f32 reference (PyG ordering: mask added after leaky_relu)
# ----------------------------------------------------------------------------
def ref_forward(params, x, edge_src, edge_dst, edge_attr, batch, task_id, cfg):
    N = x.shape[0]
    C = cfg["n_conv_hidden"]
    B = cfg["n_graphs"]
    ones = jnp.ones_like(edge_dst, dtype=jnp.float32)
    deg = jax.ops.segment_sum(ones, edge_dst, num_segments=N)
    loop_attr = jax.ops.segment_sum(edge_attr, edge_dst, num_segments=N)
    loop_attr = loop_attr / jnp.maximum(deg, 1.0)[:, None]
    src_full = jnp.concatenate([edge_src, jnp.arange(N, dtype=edge_src.dtype)])
    dst_full = jnp.concatenate([edge_dst, jnp.arange(N, dtype=edge_dst.dtype)])
    ea_full = jnp.concatenate([edge_attr, loop_attr], axis=0)
    mask_bias = jnp.full((N, N), NEG_INF, jnp.float32).at[dst_full, src_full].set(0.0)

    h = x
    n_layers = len(params["convs"])
    for li, cp in enumerate(params["convs"]):
        heads = cp["heads"]
        ef = ea_full @ cp["w_edge"]
        alpha_edge = jnp.sum(ef.reshape(-1, heads, C) * cp["att_edge"][None], axis=-1)
        alpha_e = jnp.zeros((heads, N, N), jnp.float32)
        alpha_e = alpha_e.at[:, dst_full, src_full].set(alpha_edge.T)
        xw = h @ cp["w"]
        outs = []
        for hh in range(heads):
            xw_h = xw[:, hh * C:(hh + 1) * C]
            a_s = jnp.sum(xw_h * cp["att_src"][hh][None, :], -1)
            a_d = jnp.sum(xw_h * cp["att_dst"][hh][None, :], -1)
            sc = a_d[:, None] + a_s[None, :] + alpha_e[hh]
            sc = jnp.where(sc >= 0, sc, 0.2 * sc) + mask_bias
            attn = jax.nn.softmax(sc, axis=-1)
            outs.append(attn @ xw_h)
        h = jnp.concatenate(outs, -1) + cp["bias"][None, :]
        if li < n_layers - 1:
            h = jnp.where(h >= 0, h, 0.01 * h)

    pool_mat = (batch[None, :] == jnp.arange(B)[:, None]).astype(jnp.float32)
    if cfg["pool"] == "mean":
        pool_mat = pool_mat / jnp.maximum(pool_mat.sum(-1, keepdims=True), 1.0)
    g = pool_mat @ h
    for lp in params["lin"]:
        g = g @ lp["w"] + lp["b"][None, :]
        g = jnp.where(g >= 0, g, 0.01 * g)
    op = params["out"][task_id]
    return g @ op["w"] + op["b"][None, :]


# ----------------------------------------------------------------------------
if __name__ == "__main__":
    cfg = dict(
        num_node_features=8,
        num_edge_features=4,
        n_conv=3,
        n_heads=2,
        n_conv_hidden=16,
        v2=False,            # GATConv (v1) semantics implemented
        n_lin=2,
        n_lin_hidden=32,
        pool="mean",
        n_classes=[3, 5],
        n_graphs=2,
    )

    key = jax.random.PRNGKey(0)
    key, kx, ke, kp = jax.random.split(key, 4)

    # two graphs of 8 nodes each (nodes 0..7 and 8..15), bidirectional ring edges
    N = 16
    src_list, dst_list = [], []
    for g0 in (0, 8):
        for k in range(8):
            a, b = g0 + k, g0 + (k + 1) % 8
            src_list += [a, b]
            dst_list += [b, a]
    edge_src = jnp.array(src_list, dtype=jnp.int32)
    edge_dst = jnp.array(dst_list, dtype=jnp.int32)
    E = edge_src.shape[0]

    x = jax.random.normal(kx, (N, cfg["num_node_features"]), jnp.float32)
    edge_attr = jax.random.normal(ke, (E, cfg["num_edge_features"]), jnp.float32)
    batch = jnp.array([0] * 8 + [1] * 8, dtype=jnp.int32)
    task_id = 0

    params = init_params(kp, cfg)

    logits = gat_forward(params, x, edge_src, edge_dst, edge_attr, batch, task_id, cfg)
    logits = jax.block_until_ready(logits)

    ref = ref_forward(params, x, edge_src, edge_dst, edge_attr, batch, task_id, cfg)
    assert logits.shape == (cfg["n_graphs"], cfg["n_classes"][task_id])
    # bf16 bias + bf16 MXU operands round the attention path to ~3 significant
    # digits -> allow a slightly looser tolerance than the pure-f32 version.
    assert jnp.allclose(logits, ref, atol=3e-2, rtol=3e-2), (logits, ref)

    print("KERNEL_OK")
</pallas_src>

<mosaic_0001>
module attributes {stable_mosaic.version = 11 : i64} {
  func.func @_project_kernel(%arg0: i32, %arg1: memref<1x64x8xf32, #tpu.memory_space<vmem>>, %arg2: memref<1x8x36xf32, #tpu.memory_space<vmem>>, %arg3: memref<2x64x16xbf16, #tpu.memory_space<vmem>>, %arg4: memref<64x4xf32, #tpu.memory_space<vmem>>) attributes {dimension_semantics = [#tpu.dimension_semantics<parallel>], iteration_bounds = array<i64: 2>, scalar_prefetch = 0 : i64, scratch_operands = 0 : i64, tpu.core_type = #tpu.core_type<tc>, window_params = [{transform_indices = @transform_0, window_bounds = array<i64: 1, 64, 8>}, {pipeline_mode = #tpu.pipeline_mode<synchronous>, transform_indices = @transform_1, window_bounds = array<i64: 1, 8, 36>}, {transform_indices = @transform_2, window_bounds = array<i64: 2, 64, 16>}, {transform_indices = @transform_3, window_bounds = array<i64: 64, 4>}]} {
    %cst = arith.constant 0.000000e+00 : f32
    %0 = vector.broadcast %cst : f32 to vector<64x36xf32>
    %c0 = arith.constant 0 : index
    %c0_0 = arith.constant 0 : index
    %c0_1 = arith.constant 0 : index
    %1 = vector.load %arg1[%c0, %c0_0, %c0_1] : memref<1x64x8xf32, #tpu.memory_space<vmem>>, vector<1x64x8xf32>
    %2 = vector.shape_cast %1 : vector<1x64x8xf32> to vector<64x8xf32>
    %c0_2 = arith.constant 0 : index
    %c0_3 = arith.constant 0 : index
    %c0_4 = arith.constant 0 : index
    %3 = vector.load %arg2[%c0_2, %c0_3, %c0_4] : memref<1x8x36xf32, #tpu.memory_space<vmem>>, vector<1x8x36xf32>
    %4 = vector.shape_cast %3 : vector<1x8x36xf32> to vector<8x36xf32>
    %cst_5 = arith.constant dense<0.000000e+00> : vector<64x36xf32>
    %5 = tpu.matmul %2, %4, %cst_5 {dimension_numbers = #tpu.dot_dimension_numbers<[1], [0], [0], [1], [0, 0, 1, 1], [], []>} : vector<64x8xf32>, vector<8x36xf32>, vector<64x36xf32> -> vector<64x36xf32>
    %6 = arith.addf %0, %5 : vector<64x36xf32>
    %7 = vector.extract_strided_slice %6 {offsets = [0, 0], sizes = [64, 16], strides = [1, 1]} : vector<64x36xf32> to vector<64x16xf32>
    %8 = arith.truncf %7 : vector<64x16xf32> to vector<64x16xbf16>
    %c0_6 = arith.constant 0 : index
    %c0_7 = arith.constant 0 : index
    %c0_8 = arith.constant 0 : index
    %9 = vector.load %arg3[%c0_6, %c0_7, %c0_8] : memref<2x64x16xbf16, #tpu.memory_space<vmem>>, vector<1x64x16xbf16>
    %10 = vector.shape_cast %9 : vector<1x64x16xbf16> to vector<64x16xbf16>
    %11 = vector.shape_cast %8 : vector<64x16xbf16> to vector<1x64x16xbf16>
    tpu.vector_store %arg3[%c0_6, %c0_7, %c0_8], %11 {strides = array<i32>} : memref<2x64x16xbf16, #tpu.memory_space<vmem>>, vector<1x64x16xbf16>,
    %12 = vector.extract_strided_slice %6 {offsets = [0, 16], sizes = [64, 16], strides = [1, 1]} : vector<64x36xf32> to vector<64x16xf32>
    %13 = arith.truncf %12 : vector<64x16xf32> to vector<64x16xbf16>
    %c1 = arith.constant 1 : index
    %c0_9 = arith.constant 0 : index
    %c0_10 = arith.constant 0 : index
    %14 = vector.load %arg3[%c1, %c0_9, %c0_10] : memref<2x64x16xbf16, #tpu.memory_space<vmem>>, vector<1x64x16xbf16>
    %15 = vector.shape_cast %14 : vector<1x64x16xbf16> to vector<64x16xbf16>
    %16 = vector.shape_cast %13 : vector<64x16xbf16> to vector<1x64x16xbf16>
    tpu.vector_store %arg3[%c1, %c0_9, %c0_10], %16 {strides = array<i32>} : memref<2x64x16xbf16, #tpu.memory_space<vmem>>, vector<1x64x16xbf16>,
    %17 = vector.extract_strided_slice %6 {offsets = [0, 32], sizes = [64, 4], strides = [1, 1]} : vector<64x36xf32> to vector<64x4xf32>
    %c0_11 = arith.constant 0 : index
    %c0_12 = arith.constant 0 : index
    %18 = vector.load %arg4[%c0_11, %c0_12] : memref<64x4xf32, #tpu.memory_space<vmem>>, vector<64x4xf32>
    tpu.vector_store %arg4[%c0_11, %c0_12], %17 {strides = array<i32>} : memref<64x4xf32, #tpu.memory_space<vmem>>, vector<64x4xf32>,
    return
  }
  func.func @transform_0(%arg0: i32) -> (i32, i32, i32) {
    %c0_i32 = arith.constant 0 : i32
    %c0_i32_0 = arith.constant 0 : i32
    %c0_i32_1 = arith.constant 0 : i32
    return %c0_i32, %arg0, %c0_i32_0 : i32, i32, i32
  }
  func.func @transform_1(%arg0: i32) -> (i32, i32, i32) {
    %c0_i32 = arith.constant 0 : i32
    %c0_i32_0 = arith.constant 0 : i32
    %c0_i32_1 = arith.constant 0 : i32
    %c0_i32_2 = arith.constant 0 : i32
    return %c0_i32, %c0_i32_0, %c0_i32_1 : i32, i32, i32
  }
  func.func @transform_2(%arg0: i32) -> (i32, i32, i32) {
    %c0_i32 = arith.constant 0 : i32
    %c0_i32_0 = arith.constant 0 : i32
    %c0_i32_1 = arith.constant 0 : i32
    return %c0_i32, %arg0, %c0_i32_0 : i32, i32, i32
  }
  func.func @transform_3(%arg0: i32) -> (i32, i32) {
    %c0_i32 = arith.constant 0 : i32
    %c0_i32_0 = arith.constant 0 : i32
    return %arg0, %c0_i32 : i32, i32
  }
}

</mosaic_0001>

<llo_original>
// kernel: tpu_custom_call.1
$region0: #{tpu_custom_call.1}
  #allocation0 [shape = 'u32[]', space=smem, size = 0x4, offset = 0x4, fixed_abs, tag = 'smem constant byte address 0x4 - core index']
  #allocation1 [shape = 'u32[144,128]{1,0:T(1,128)}', space=vmem, size = 0x12000, scoped, tag = 'internal scratch']
  %s0 = inlined_call_operand.vmem [shape: f32[1,128,8], index: 0, kind: input, shape index: {}]
  %s1 = inlined_call_operand.vmem [shape: f32[1,8,36], index: 1, kind: input, shape index: {}]
  %s2 = inlined_call_operand.vmem [shape: bf16[2,128,16], index: 2, kind: output, shape index: {0}]
  %s3 = inlined_call_operand.vmem [shape: f32[128,4], index: 3, kind: output, shape index: {1}]
  %4 = xla_tuple %s2, %s3
  %s5 = sld [smem:[#allocation0]]
  $region86: #{tpu_custom_call.1} parent=0
    _
  %s7 = ssub.s32 1, %s5
  %s8 = scalar_select 0, %s7, %s5
  $region1: #{tpu_custom_call.1} parent=0
    #allocation2 [shape = 'u8[65536]{0}', space=vmem, size = 0x10000, scoped, tag = 'output window, operand 0']
    loop: start=0, step=1, limit=4
    $region2: #{tpu_custom_call.1} parent=1 // loop_pre_header
      _
    $region3: #{tpu_custom_call.1} parent=1 // loop_header
      %s10 = sphi 0, %s14
      %p11 = scmp.ge.s32.totalorder %s10, 4
      %s20 = sphi 0, %s22
      %s23 = sphi 0, %s20
      %s24 = sphi 0, %s23
      %s40 = sphi 0, %s24
      %s44 = sphi 0, %s44
      %s46 = sphi 0, %s44
      %s47 = sphi 0, %s46
      %s61 = sphi 0, %s47
      %s67 = sphi 0, %s69
      %s70 = sphi 0, %s67
      %s71 = sphi 0, %s70
      %s87 = sphi 0, %s71
      %s93 = sphi 0, %s95
      %s96 = sphi 0, %s93
      %s97 = sphi 0, %s96
      %s113 = sphi 0, %s97
    $region4: #{tpu_custom_call.1} parent=1 // loop_header_branch
      %13 = sbr.rel (%p11) target = $region8
    $region5: #{tpu_custom_call.1} parent=1 // loop_body
      %s15 = ssub.s32 %s10, 1
      %s16 = ssub.s32 %s10, 2
      %s17 = sadd.s32 %s10, 1
      %s18 = ssub.s32 %s10, %s17
      %p19 = scmp.eq.s32.totalorder %s18, 0
      %s21 = sadd.s32 %s20, 1
      %s22 = scalar_select %p19, %s20, %s21
      %p25 = pneg %p19
      %p26 = scmp.eq.s32.totalorder %s10, 1
      %p27 = por %p25, %p26
      %p28 = scmp.ne.s32.totalorder %s20, %s23
      %p29 = scmp.eq.s32.totalorder %s10, 0
      %p30 = por %p28, %p29
      %p31 = scmp.ne.s32.totalorder %s20, %s23
      %p32 = scmp.eq.s32.totalorder %s15, 1
      %p33 = por %p31, %p32
      %p34 = scmp.ne.s32.totalorder %s23, %s24
      %p35 = scmp.eq.s32.totalorder %s15, 0
      %p36 = por %p34, %p35
      %p37 = scmp.ne.s32.totalorder %s23, %s24
      %p38 = scmp.eq.s32.totalorder %s16, 1
      %p39 = por %p37, %p38
      %p41 = scmp.ne.s32.totalorder %s24, %s40
      %p42 = scmp.eq.s32.totalorder %s16, 0
      %p43 = por %p41, %p42
      %s45 = sadd.s32 %s44, 1
      %p48 = scmp.eq.s32.totalorder %s10, 1
      %p49 = scmp.ne.s32.totalorder %s44, %s46
      %p50 = scmp.eq.s32.totalorder %s10, 0
      %p51 = por %p49, %p50
      %p52 = scmp.ne.s32.totalorder %s44, %s46
      %p53 = scmp.eq.s32.totalorder %s15, 1
      %p54 = por %p52, %p53
      %p55 = scmp.ne.s32.totalorder %s46, %s47
      %p56 = scmp.eq.s32.totalorder %s15, 0
      %p57 = por %p55, %p56
      %p58 = scmp.ne.s32.totalorder %s46, %s47
      %p59 = scmp.eq.s32.totalorder %s16, 1
      %p60 = por %p58, %p59
      %p62 = scmp.ne.s32.totalorder %s47, %s61
      %p63 = scmp.eq.s32.totalorder %s16, 0
      %p64 = por %p62, %p63
      %s65 = ssub.s32 %s10, %s17
      %p66 = scmp.eq.s32.totalorder %s65, 0
      %s68 = sadd.s32 %s67, 1
      %s69 = scalar_select %p66, %s67, %s68
      %p72 = pneg %p66
      %p73 = scmp.eq.s32.totalorder %s10, 1
      %p74 = por %p72, %p73
      %p75 = scmp.ne.s32.totalorder %s67, %s70
      %p76 = scmp.eq.s32.totalorder %s10, 0
      %p77 = por %p75, %p76
      %p78 = scmp.ne.s32.totalorder %s67, %s70
      %p79 = scmp.eq.s32.totalorder %s15, 1
      %p80 = por %p78, %p79
      %p81 = scmp.ne.s32.totalorder %s70, %s71
      %p82 = scmp.eq.s32.totalorder %s15, 0
      %p83 = por %p81, %p82
      %p84 = scmp.ne.s32.totalorder %s70, %s71
      %p85 = scmp.eq.s32.totalorder %s16, 1
      %p86 = por %p84, %p85
      %p88 = scmp.ne.s32.totalorder %s71, %s87
      %p89 = scmp.eq.s32.totalorder %s16, 0
      %p90 = por %p88, %p89
      %s91 = ssub.s32 %s10, %s17
      %p92 = scmp.eq.s32.totalorder %s91, 0
      %s94 = sadd.s32 %s93, 1
      %s95 = scalar_select %p92, %s93, %s94
      %p98 = pneg %p92
      %p99 = scmp.eq.s32.totalorder %s10, 1
      %p100 = por %p98, %p99
      %p101 = scmp.ne.s32.totalorder %s93, %s96
      %p102 = scmp.eq.s32.totalorder %s10, 0
      %p103 = por %p101, %p102
      %p104 = scmp.ne.s32.totalorder %s93, %s96
      %p105 = scmp.eq.s32.totalorder %s15, 1
      %p106 = por %p104, %p105
      %p107 = scmp.ne.s32.totalorder %s96, %s97
      %p108 = scmp.eq.s32.totalorder %s15, 0
      %p109 = por %p107, %p108
      %p110 = scmp.ne.s32.totalorder %s96, %s97
      %p111 = scmp.eq.s32.totalorder %s16, 1
      %p112 = por %p110, %p111
      %p114 = scmp.ne.s32.totalorder %s97, %s113
      %p115 = scmp.eq.s32.totalorder %s16, 0
      %p116 = por %p114, %p115
      %p117 = scmp.le.s32.totalorder 1, %s10
      %p118 = scmp.lt.s32.totalorder %s10, 3
      %p119 = pnand %p117, %p118
      %p120 = pneg %p119
      // Predicated region
      $region9: #{tpu_custom_call.1} parent=5 // pred_check
        _
      $region10: #{tpu_custom_call.1} parent=5 // pred_check_branch
        %122 = sbr.rel (%p119) target = $region12
      $region11: #{tpu_custom_call.1} parent=5 // pred_region
        %s123 = ssub.s32 %s10, 1
        // Predicated region
        $region13: #{tpu_custom_call.1} parent=11 // pred_check
          %p124 = pneg %p57
        $region14: #{tpu_custom_call.1} parent=11 // pred_check_branch
          %126 = sbr.rel (%p124) target = $region16
        $region15: #{tpu_custom_call.1} parent=11 // pred_region
          _
        $region16: #{tpu_custom_call.1} parent=11 // pred_fallthru
          _
      $region12: #{tpu_custom_call.1} parent=5 // pred_fallthru
        _
      %p127 = scmp.lt.s32.totalorder %s10, 2
      // Predicated region
      $region17: #{tpu_custom_call.1} parent=5 // pred_check
        %p128 = pneg %p127
      $region18: #{tpu_custom_call.1} parent=5 // pred_check_branch
        %130 = sbr.rel (%p128) target = $region20
      $region19: #{tpu_custom_call.1} parent=5 // pred_region
        // Predicated region
        $region21: #{tpu_custom_call.1} parent=19 // pred_check
          %p131 = pneg %p30
        $region22: #{tpu_custom_call.1} parent=19 // pred_check_branch
          %133 = sbr.rel (%p131) target = $region24
        $region23: #{tpu_custom_call.1} parent=19 // pred_region
          %s134 = smul.u32 8, %s10
          %p135 = scmp.lt.s32.totalorder %s134, 15
          %s136 = scalar_select %p135, %s134, 15
          %s137 = smul.addr %s136, 8
          %s138 = scalar_lea.vmem %s0, %s137
          %s139 = smul.u32 8, %s10
        $region24: #{tpu_custom_call.1} parent=19 // pred_fallthru
          _
      $region20: #{tpu_custom_call.1} parent=5 // pred_fallthru
        _
      %p140 = scmp.le.s32.totalorder 1, %s10
      %p141 = scmp.lt.s32.totalorder %s10, 3
      %p142 = pnand %p140, %p141
      %p143 = pneg %p142
      // Predicated region
      $region25: #{tpu_custom_call.1} parent=5 // pred_check
        _
      $region26: #{tpu_custom_call.1} parent=5 // pred_check_branch
        %145 = sbr.rel (%p142) target = $region28
      $region27: #{tpu_custom_call.1} parent=5 // pred_region
        %s146 = ssub.s32 %s10, 1
        %s147 = smul.u32 8, %s15
        %p148 = scmp.lt.s32.totalorder %s147, 15
        %s149 = scalar_select %p148, %s147, 15
        %s150 = smul.addr %s149, 8
        %s151 = scalar_lea.vmem %s0, %s150
        %p152 = pneg %p36
        %p153 = pneg %p33
        %p154 = pneg %p57
        %p155 = pneg %p54
        %p156 = pneg %p83
        %p157 = pneg %p80
        %s158 = sand.u32 %s70, 1
        %s159 = sand.u32 %s70, 1
        %s160 = smul.addr %s159, 64
        %s161 = scalar_lea.vmem [#allocation2], %s160
        %p162 = pneg %p109
        %p163 = pneg %p106
        %s164 = smul.u32 8, %s15
        %p165 = scmp.lt.s32.totalorder %s164, 15
        %s166 = scalar_select %p165, %s164, 15
        %s167 = smul.addr %s166, 8
        %s168 = scalar_lea.vmem %s3, %s167
        %s169 = smul.u32 8, %s15
        %p170 = scmp.lt.s32.totalorder %s169, 15
        %s171 = scalar_select %p170, %s169, 15
        %s172 = smul.addr %s171, 8
        %s173 = scalar_lea.vmem %s0, %s172
        %s174 = smul.u32 8, %s15
        %s175 = smul.u32 8, %s15
        %s176 = smul.u32 8, %s15
        %p177 = scmp.lt.s32.totalorder %s176, 15
        %s178 = scalar_select %p177, %s176, 15
        %s179 = smul.addr %s178, 8
        %s180 = scalar_lea.vmem %s3, %s179
        %s181 = smul.u32 8, %s15
        %v182 = vld [vmem:[%s173] sm:$0xff]
        %v183 = vld [vmem:[%s173 + $0x8] sm:$0xff]
        %v184 = vld [vmem:[%s173 + $0x10] sm:$0xff]
        %v185 = vld [vmem:[%s173 + $0x18] sm:$0xff]
        %v186 = vld [vmem:[%s173 + $0x20] sm:$0xff]
        %v187 = vld [vmem:[%s173 + $0x28] sm:$0xff]
        %v188 = vld [vmem:[%s173 + $0x30] sm:$0xff]
        %v189 = vld [vmem:[%s173 + $0x38] sm:$0xff]
        %v190 = vld [vmem:[%s1] sm:$0xff]
        %vm191 = vcmask 64512
        %v193 = vsel %vm191, %v182, 0
        %v196 = vsel %vm191, %v183, 0
        %v199 = vsel %vm191, %v184, 0
        %v202 = vsel %vm191, %v185, 0
        %v205 = vsel %vm191, %v186, 0
        %v208 = vsel %vm191, %v187, 0
        %v211 = vsel %vm191, %v188, 0
        %v214 = vsel %vm191, %v189, 0
        %216 = vmatprep.subr.mxu0 0.0
        %217 = vmatpush1.msra.mxu0 %v190
        %218 = vmatprep.subr.mxu0 0.0
        %219 = vmatpush1.msra.mxu0 0.0
        %220 = vmatprep.subr.mxu0 0.0
        %221 = vmatpush1.msra.mxu0 0.0
        %222 = vmatprep.subr.mxu0 0.0
        %223 = vmatpush1.msra.mxu0 0.0
        %224 = vmatprep.subr.mxu0 0.0
        %225 = vmatpush1.msra.mxu0 0.0
        %226 = vmatprep.subr.mxu0 0.0
        %227 = vmatpush1.msra.mxu0 0.0
        %228 = vmatprep.subr.mxu0 0.0
        %229 = vmatpush1.msra.mxu0 0.0
        %230 = vmatprep.subr.mxu0 0.0
        %231 = vmatpush1.msra.mxu0 0.0
        %232 = vmatprep.subr.mxu0 0.0
        %233 = vmatpush1.msra.mxu0 0.0
        %234 = vmatprep.subr.mxu0 0.0
        %235 = vmatpush1.msra.mxu0 0.0
        %236 = vmatprep.subr.mxu0 0.0
        %237 = vmatpush1.msra.mxu0 0.0
        %238 = vmatprep.subr.mxu0 0.0
        %239 = vmatpush1.msra.mxu0 0.0
        %240 = vmatprep.subr.mxu0 0.0
        %241 = vmatpush1.msra.mxu0 0.0
        %242 = vmatprep.subr.mxu0 0.0
        %243 = vmatpush1.msra.mxu0 0.0
        %244 = vmatprep.subr.mxu0 0.0
        %245 = vmatpush1.msra.mxu0 0.0
        %246 = vmatprep.subr.mxu0 0.0
        %247 = vmatpush1.msra.mxu0 0.0
        %248 = vmatprep.subr.mxu0 0.0
        %249 = vmatpush1.msra.mxu0 0.0
        %250 = vmatprep.subr.mxu0 0.0
        %251 = vmatpush1.msra.mxu0 0.0
        %252 = vmatprep.subr.mxu0 0.0
        %253 = vmatpush1.msra.mxu0 0.0
        %254 = vmatprep.subr.mxu0 0.0
        %255 = vmatpush1.msra.mxu0 0.0
        %256 = vmatprep.subr.mxu0 0.0
        %257 = vmatpush1.msra.mxu0 0.0
        %258 = vmatprep.subr.mxu0 0.0
        %259 = vmatpush1.msra.mxu0 0.0
        %260 = vmatprep.subr.mxu0 0.0
        %261 = vmatpush1.msra.mxu0 0.0
        %262 = vmatprep.subr.mxu0 0.0
        %263 = vmatpush1.msra.mxu0 0.0
        %264 = vmatprep.subr.mxu0 0.0
        %265 = vmatpush1.msra.mxu0 0.0
        %266 = vmatprep.subr.mxu0 0.0
        %267 = vmatpush1.msra.mxu0 0.0
        %268 = vmatprep.subr.mxu0 0.0
        %269 = vmatpush1.msra.mxu0 0.0
        %270 = vmatprep.subr.mxu0 0.0
        %271 = vmatpush1.msra.mxu0 0.0
        %272 = vmatprep.subr.mxu0 0.0
        %273 = vmatpush1.msra.mxu0 0.0
        %274 = vmatprep.subr.mxu0 0.0
        %275 = vmatpush1.msra.mxu0 0.0
        %276 = vmatprep.subr.mxu0 0.0
        %277 = vmatpush1.msra.mxu0 0.0
        %278 = vmatprep.subr.mxu0 0.0
        %279 = vmatpush1.msra.mxu0 0.0
        %280 = vmatprep.mubr.f32.mxu0 0.0
        %281 = vmatmul.mubr.f32.gmra.mrb[0].mxu0 %v193
        %v282 = vpop.f32.mrb[0].mxu0
        %v283 = vadd.f32 0.0, %v282
        %v284 = vpop.f32.mrb[0].mxu0
        %285 = vmatprep.mubr.f32.mxu0 0.0
        %286 = vmatmul.mubr.f32.gmra.mrb[0].mxu0 %v196
        %v287 = vpop.f32.mrb[0].mxu0
        %v288 = vadd.f32 0.0, %v287
        %v289 = vpop.f32.mrb[0].mxu0
        %290 = vmatprep.mubr.f32.mxu0 0.0
        %291 = vmatmul.mubr.f32.gmra.mrb[0].mxu0 %v199
        %v292 = vpop.f32.mrb[0].mxu0
        %v293 = vadd.f32 0.0, %v292
        %v294 = vpop.f32.mrb[0].mxu0
        %295 = vmatprep.mubr.f32.mxu0 0.0
        %296 = vmatmul.mubr.f32.gmra.mrb[0].mxu0 %v202
        %v297 = vpop.f32.mrb[0].mxu0
        %v298 = vadd.f32 0.0, %v297
        %v299 = vpop.f32.mrb[0].mxu0
        %300 = vmatprep.mubr.f32.mxu0 0.0
        %301 = vmatmul.mubr.f32.gmra.mrb[0].mxu0 %v205
        %v302 = vpop.f32.mrb[0].mxu0
        %v303 = vadd.f32 0.0, %v302
        %v304 = vpop.f32.mrb[0].mxu0
        %305 = vmatprep.mubr.f32.mxu0 0.0
        %306 = vmatmul.mubr.f32.gmra.mrb[0].mxu0 %v208
        %v307 = vpop.f32.mrb[0].mxu0
        %v308 = vadd.f32 0.0, %v307
        %v309 = vpop.f32.mrb[0].mxu0
        %310 = vmatprep.mubr.f32.mxu0 0.0
        %311 = vmatmul.mubr.f32.gmra.mrb[0].mxu0 %v211
        %v312 = vpop.f32.mrb[0].mxu0
        %v313 = vadd.f32 0.0, %v312
        %v314 = vpop.f32.mrb[0].mxu0
        %315 = vmatprep.mubr.f32.mxu0 0.0
        %316 = vmatmul.mubr.f32.gmra.mrb[0].mxu0 %v214
        %v317 = vpop.f32.mrb[0].mxu0
        %v318 = vadd.f32 0.0, %v317
        %v319 = vpop.f32.mrb[0].mxu0
        %320 = vdwg.mxu0
        %v321 = vpack.c.bf16 %v288, %v283
        %v322 = vpack.c.bf16 %v298, %v293
        %v323 = vpack.c.bf16 %v308, %v303
        %v324 = vpack.c.bf16 %v318, %v313
        %v329 = vunpack.c.l.b16 %v321
        %v330 = vunpack.c.h.b16 %v321
        %v331 = vunpack.c.l.b16 %v322
        %v332 = vunpack.c.h.b16 %v322
        %v333 = vunpack.c.l.b16 %v323
        %v334 = vunpack.c.h.b16 %v323
        %v335 = vunpack.c.l.b16 %v324
        %v336 = vunpack.c.h.b16 %v324
        %v337 = vpack.c.b16 %v329, %v329
        %v338 = vpack.c.b16 %v330, %v330
        %v339 = vpack.c.b16 %v331, %v331
        %v340 = vpack.c.b16 %v332, %v332
        %v341 = vpack.c.b16 %v333, %v333
        %v342 = vpack.c.b16 %v334, %v334
        %v343 = vpack.c.b16 %v335, %v335
        %v344 = vpack.c.b16 %v336, %v336
        %vm353 = vcmask 125952
        %354 = vst.msk [vmem:[%s161] sm:$0xf] %vm353, %v337
        %355 = vst.msk [vmem:[%s161 + $0x4] sm:$0xf] %vm353, %v338
        %356 = vst.msk [vmem:[%s161 + $0x8] sm:$0xf] %vm353, %v339
        %357 = vst.msk [vmem:[%s161 + $0xc] sm:$0xf] %vm353, %v340
        %358 = vst.msk [vmem:[%s161 + $0x10] sm:$0xf] %vm353, %v341
        %359 = vst.msk [vmem:[%s161 + $0x14] sm:$0xf] %vm353, %v342
        %360 = vst.msk [vmem:[%s161 + $0x18] sm:$0xf] %vm353, %v343
        %361 = vst.msk [vmem:[%s161 + $0x1c] sm:$0xf] %vm353, %v344
        %362 = vrot.lane.b32.xlu0 %v337, 112
        %v363 = vpop.permute.xlu0 %362
        %364 = vrot.lane.b32.xlu0 %v338, 112
        %v365 = vpop.permute.xlu0 %364
        %366 = vrot.lane.b32.xlu0 %v339, 112
        %v367 = vpop.permute.xlu0 %366
        %368 = vrot.lane.b32.xlu0 %v340, 112
        %v369 = vpop.permute.xlu0 %368
        %370 = vrot.lane.b32.xlu0 %v341, 112
        %v371 = vpop.permute.xlu0 %370
        %372 = vrot.lane.b32.xlu0 %v342, 112
        %v373 = vpop.permute.xlu0 %372
        %374 = vrot.lane.b32.xlu0 %v343, 112
        %v375 = vpop.permute.xlu0 %374
        %376 = vrot.lane.b32.xlu0 %v344, 112
        %v377 = vpop.permute.xlu0 %376
        %s386 = scalar_lea.vmem %s161, 32 [#allocation2]
        %387 = vst.msk [vmem:[%s386] sm:$0xf] %vm353, %v363
        %388 = vst.msk [vmem:[%s386 + $0x4] sm:$0xf] %vm353, %v365
        %389 = vst.msk [vmem:[%s386 + $0x8] sm:$0xf] %vm353, %v367
        %390 = vst.msk [vmem:[%s386 + $0xc] sm:$0xf] %vm353, %v369
        %391 = vst.msk [vmem:[%s386 + $0x10] sm:$0xf] %vm353, %v371
        %392 = vst.msk [vmem:[%s386 + $0x14] sm:$0xf] %vm353, %v373
        %393 = vst.msk [vmem:[%s386 + $0x18] sm:$0xf] %vm353, %v375
        %394 = vst.msk [vmem:[%s386 + $0x1c] sm:$0xf] %vm353, %v377
        %403 = vrot.lane.b32.xlu0 %v283, 96
        %v404 = vpop.permute.xlu0 %403
        %405 = vrot.lane.b32.xlu0 %v288, 96
        %v406 = vpop.permute.xlu0 %405
        %407 = vrot.lane.b32.xlu0 %v293, 96
        %v408 = vpop.permute.xlu0 %407
        %409 = vrot.lane.b32.xlu0 %v298, 96
        %v410 = vpop.permute.xlu0 %409
        %411 = vrot.lane.b32.xlu0 %v303, 96
        %v412 = vpop.permute.xlu0 %411
        %413 = vrot.lane.b32.xlu0 %v308, 96
        %v414 = vpop.permute.xlu0 %413
        %415 = vrot.lane.b32.xlu0 %v313, 96
        %v416 = vpop.permute.xlu0 %415
        %417 = vrot.lane.b32.xlu0 %v318, 96
        %v418 = vpop.permute.xlu0 %417
        %vm427 = vcmask 31744
        %428 = vst.msk [vmem:[%s180] sm:$0xff] %vm427, %v404
        %429 = vst.msk [vmem:[%s180 + $0x8] sm:$0xff] %vm427, %v406
        %430 = vst.msk [vmem:[%s180 + $0x10] sm:$0xff] %vm427, %v408
        %431 = vst.msk [vmem:[%s180 + $0x18] sm:$0xff] %vm427, %v410
        %432 = vst.msk [vmem:[%s180 + $0x20] sm:$0xff] %vm427, %v412
        %433 = vst.msk [vmem:[%s180 + $0x28] sm:$0xff] %vm427, %v414
        %434 = vst.msk [vmem:[%s180 + $0x30] sm:$0xff] %vm427, %v416
        %435 = vst.msk [vmem:[%s180 + $0x38] sm:$0xff] %vm427, %v418
        %s436 = sand.u32 %s70, 1
        %s437 = sand.u32 %s70, 1
        %s438 = smul.addr %s437, 64
        %s439 = scalar_lea.vmem [#allocation2], %s438
        %s440 = smul.u32 8, %s15
        %p441 = scmp.lt.s32.totalorder %s440, 15
        %s442 = scalar_select %p441, %s440, 15
        %s443 = smul.addr %s442, 8
        %s444 = scalar_lea.vmem %s3, %s443
        // Predicated region
        $region29: #{tpu_custom_call.1} parent=27 // pred_check
          %p445 = pneg %p80
        $region30: #{tpu_custom_call.1} parent=27 // pred_check_branch
          %447 = sbr.rel (%p445) target = $region32
        $region31: #{tpu_custom_call.1} parent=27 // pred_region
          %s448 = smul.u32 8, %s15
          %s449 = smul.addr %s448, 4
          %s450 = scalar_lea.vmem %s2, %s449
          // Predicated region
          $region33: #{tpu_custom_call.1} parent=31 // pred_check
            _
          $region34: #{tpu_custom_call.1} parent=31 // pred_check_branch
            %452 = sbr.rel (0) target = $region36
          $region35: #{tpu_custom_call.1} parent=31 // pred_region
            // Predicated region
            $region37: #{tpu_custom_call.1} parent=35 // pred_check
              _
            $region38: #{tpu_custom_call.1} parent=35 // pred_check_branch
              %454 = sbr.rel target = $region40
            $region39: #{tpu_custom_call.1} parent=35 // pred_region
              // Predicated region
              $region52: #{tpu_custom_call.1} parent=39 // pred_check
                _
              $region53: #{tpu_custom_call.1} parent=39 // pred_check_branch
                %499 = sbr.rel (0) target = $region55
              $region54: #{tpu_custom_call.1} parent=39 // pred_region
                loop: start=0, step=1, limit=1
                $region56: #{tpu_custom_call.1} parent=54 // loop_pre_header
                  _
                $region57: #{tpu_custom_call.1} parent=54 // loop_header
                  %s501 = sphi 0, %s505
                  %p502 = scmp.ge.s32.totalorder %s501, 1
                  %s506 = sphi %s439, %s439
                  %s507 = sphi %s450, %s450
                $region58: #{tpu_custom_call.1} parent=54 // loop_header_branch
                  %504 = sbr.rel (%p502) target = $region62
                $region59: #{tpu_custom_call.1} parent=54 // loop_body
                  _
                $region60: #{tpu_custom_call.1} parent=54 // loop_footer
                  %s505 = sadd.s32 1, %s501
                $region61: #{tpu_custom_call.1} parent=54 // loop_footer_branch
                  %500 = sbr.rel target = $region57
                $region62: #{tpu_custom_call.1} parent=54 // loop_exit
                  _
                loop: start=0, step=1, limit=1
                $region63: #{tpu_custom_call.1} parent=54 // loop_pre_header
                  _
                $region64: #{tpu_custom_call.1} parent=54 // loop_header
                  %s510 = sphi 0, %s514
                  %p511 = scmp.ge.s32.totalorder %s510, 1
                  %s515 = sphi %s439, %s439
                  %s516 = sphi %s450, %s450
                $region65: #{tpu_custom_call.1} parent=54 // loop_header_branch
                  %513 = sbr.rel (%p511) target = $region69
                $region66: #{tpu_custom_call.1} parent=54 // loop_body
                  %v517 = vld [vmem:[%s515] sm:$0xf]
                  %518 = vst [vmem:[%s516] sm:$0xf] %v517
                  %v519 = vld [vmem:[%s515 + $0x4] sm:$0xf]
                  %520 = vst [vmem:[%s516 + $0x4] sm:$0xf] %v519
                  %v521 = vld [vmem:[%s515 + $0x8] sm:$0xf]
                  %522 = vst [vmem:[%s516 + $0x8] sm:$0xf] %v521
                  %v523 = vld [vmem:[%s515 + $0xc] sm:$0xf]
                  %524 = vst [vmem:[%s516 + $0xc] sm:$0xf] %v523
                  %v525 = vld [vmem:[%s515 + $0x10] sm:$0xf]
                  %526 = vst [vmem:[%s516 + $0x10] sm:$0xf] %v525
                  %v527 = vld [vmem:[%s515 + $0x14] sm:$0xf]
                  %528 = vst [vmem:[%s516 + $0x14] sm:$0xf] %v527
                  %v529 = vld [vmem:[%s515 + $0x18] sm:$0xf]
                  %530 = vst [vmem:[%s516 + $0x18] sm:$0xf] %v529
                  %v531 = vld [vmem:[%s515 + $0x1c] sm:$0xf]
                  %532 = vst [vmem:[%s516 + $0x1c] sm:$0xf] %v531
                  %v533 = vld [vmem:[%s515 + $0x20] sm:$0xf]
                  %534 = vst [vmem:[%s516 + $0x40] sm:$0xf] %v533
                  %v535 = vld [vmem:[%s515 + $0x24] sm:$0xf]
                  %536 = vst [vmem:[%s516 + $0x44] sm:$0xf] %v535
                  %v537 = vld [vmem:[%s515 + $0x28] sm:$0xf]
                  %538 = vst [vmem:[%s516 + $0x48] sm:$0xf] %v537
                  %v539 = vld [vmem:[%s515 + $0x2c] sm:$0xf]
                  %540 = vst [vmem:[%s516 + $0x4c] sm:$0xf] %v539
                  %v541 = vld [vmem:[%s515 + $0x30] sm:$0xf]
                  %542 = vst [vmem:[%s516 + $0x50] sm:$0xf] %v541
                  %v543 = vld [vmem:[%s515 + $0x34] sm:$0xf]
                  %544 = vst [vmem:[%s516 + $0x54] sm:$0xf] %v543
                  %v545 = vld [vmem:[%s515 + $0x38] sm:$0xf]
                  %546 = vst [vmem:[%s516 + $0x58] sm:$0xf] %v545
                  %v547 = vld [vmem:[%s515 + $0x3c] sm:$0xf]
                  %548 = vst [vmem:[%s516 + $0x5c] sm:$0xf] %v547
                $region67: #{tpu_custom_call.1} parent=54 // loop_footer
                  %s514 = sadd.s32 1, %s510
                $region68: #{tpu_custom_call.1} parent=54 // loop_footer_branch
                  %509 = sbr.rel target = $region64
                $region69: #{tpu_custom_call.1} parent=54 // loop_exit
                  _
              $region55: #{tpu_custom_call.1} parent=39 // pred_fallthru
                _
            $region40: #{tpu_custom_call.1} parent=35 // pred_fallthru
              _
            // Predicated region
            $region41: #{tpu_custom_call.1} parent=35 // pred_check
              _
            $region42: #{tpu_custom_call.1} parent=35 // pred_check_branch
              %456 = sbr.rel (0) target = $region44
            $region43: #{tpu_custom_call.1} parent=35 // pred_region
              loop: start=0, step=1, limit=1
              $region45: #{tpu_custom_call.1} parent=43 // loop_pre_header
                _
              $region46: #{tpu_custom_call.1} parent=43 // loop_header
                %s459 = sphi 0, %s463
                %p460 = scmp.ge.s32.totalorder %s459, 1
                %s464 = sphi %s439, %s439
                %s465 = sphi %s450, %s450
              $region47: #{tpu_custom_call.1} parent=43 // loop_header_branch
                %462 = sbr.rel (%p460) target = $region51
              $region48: #{tpu_custom_call.1} parent=43 // loop_body
                %v466 = vld [vmem:[%s464] sm:$0xf]
                %467 = vst [vmem:[%s465] sm:$0xf] %v466
                %v468 = vld [vmem:[%s464 + $0x4] sm:$0xf]
                %469 = vst [vmem:[%s465 + $0x4] sm:$0xf] %v468
                %v470 = vld [vmem:[%s464 + $0x8] sm:$0xf]
                %471 = vst [vmem:[%s465 + $0x8] sm:$0xf] %v470
                %v472 = vld [vmem:[%s464 + $0xc] sm:$0xf]
                %473 = vst [vmem:[%s465 + $0xc] sm:$0xf] %v472
                %v474 = vld [vmem:[%s464 + $0x10] sm:$0xf]
                %475 = vst [vmem:[%s465 + $0x10] sm:$0xf] %v474
                %v476 = vld [vmem:[%s464 + $0x14] sm:$0xf]
                %477 = vst [vmem:[%s465 + $0x14] sm:$0xf] %v476
                %v478 = vld [vmem:[%s464 + $0x18] sm:$0xf]
                %479 = vst [vmem:[%s465 + $0x18] sm:$0xf] %v478
                %v480 = vld [vmem:[%s464 + $0x1c] sm:$0xf]
                %481 = vst [vmem:[%s465 + $0x1c] sm:$0xf] %v480
                %v482 = vld [vmem:[%s464 + $0x20] sm:$0xf]
                %483 = vst [vmem:[%s465 + $0x40] sm:$0xf] %v482
                %v484 = vld [vmem:[%s464 + $0x24] sm:$0xf]
                %485 = vst [vmem:[%s465 + $0x44] sm:$0xf] %v484
                %v486 = vld [vmem:[%s464 + $0x28] sm:$0xf]
                %487 = vst [vmem:[%s465 + $0x48] sm:$0xf] %v486
                %v488 = vld [vmem:[%s464 + $0x2c] sm:$0xf]
                %489 = vst [vmem:[%s465 + $0x4c] sm:$0xf] %v488
                %v490 = vld [vmem:[%s464 + $0x30] sm:$0xf]
                %491 = vst [vmem:[%s465 + $0x50] sm:$0xf] %v490
                %v492 = vld [vmem:[%s464 + $0x34] sm:$0xf]
                %493 = vst [vmem:[%s465 + $0x54] sm:$0xf] %v492
                %v494 = vld [vmem:[%s464 + $0x38] sm:$0xf]
                %495 = vst [vmem:[%s465 + $0x58] sm:$0xf] %v494
                %v496 = vld [vmem:[%s464 + $0x3c] sm:$0xf]
                %497 = vst [vmem:[%s465 + $0x5c] sm:$0xf] %v496
              $region49: #{tpu_custom_call.1} parent=43 // loop_footer
                %s463 = sadd.s32 1, %s459
              $region50: #{tpu_custom_call.1} parent=43 // loop_footer_branch
                %458 = sbr.rel target = $region46
              $region51: #{tpu_custom_call.1} parent=43 // loop_exit
                _
            $region44: #{tpu_custom_call.1} parent=35 // pred_fallthru
              _
          $region36: #{tpu_custom_call.1} parent=31 // pred_fallthru
            _
          %549 = vnop
        $region32: #{tpu_custom_call.1} parent=27 // pred_fallthru
          _
        // Predicated region
        $region70: #{tpu_custom_call.1} parent=27 // pred_check
          %p550 = pneg %p106
        $region71: #{tpu_custom_call.1} parent=27 // pred_check_branch
          %552 = sbr.rel (%p550) target = $region73
        $region72: #{tpu_custom_call.1} parent=27 // pred_region
          %s553 = smul.u32 8, %s15
        $region73: #{tpu_custom_call.1} parent=27 // pred_fallthru
          _
      $region28: #{tpu_custom_call.1} parent=5 // pred_fallthru
        _
      %p554 = scmp.le.s32.totalorder 2, %s10
      // Predicated region
      $region74: #{tpu_custom_call.1} parent=5 // pred_check
        %p555 = pneg %p554
      $region75: #{tpu_custom_call.1} parent=5 // pred_check_branch
        %557 = sbr.rel (%p555) target = $region77
      $region76: #{tpu_custom_call.1} parent=5 // pred_region
        %s558 = ssub.s32 %s10, 2
        // Predicated region
        $region78: #{tpu_custom_call.1} parent=76 // pred_check
          %p559 = pneg %p86
        $region79: #{tpu_custom_call.1} parent=76 // pred_check_branch
          %561 = sbr.rel (%p559) target = $region81
        $region80: #{tpu_custom_call.1} parent=76 // pred_region
          %s562 = sand.u32 %s71, 1
          %s563 = sand.u32 %s71, 1
          %s564 = smul.addr %s563, 64
          %s565 = scalar_lea.vmem [#allocation2], %s564
        $region81: #{tpu_custom_call.1} parent=76 // pred_fallthru
          _
        // Predicated region
        $region82: #{tpu_custom_call.1} parent=76 // pred_check
          %p566 = pneg %p112
        $region83: #{tpu_custom_call.1} parent=76 // pred_check_branch
          %568 = sbr.rel (%p566) target = $region85
        $region84: #{tpu_custom_call.1} parent=76 // pred_region
          %s569 = smul.u32 8, %s16
          %p570 = scmp.lt.s32.totalorder %s569, 15
          %s571 = scalar_select %p570, %s569, 15
          %s572 = smul.addr %s571, 8
          %s573 = scalar_lea.vmem %s3, %s572
        $region85: #{tpu_custom_call.1} parent=76 // pred_fallthru
          _
      $region77: #{tpu_custom_call.1} parent=5 // pred_fallthru
        _
    $region6: #{tpu_custom_call.1} parent=1 // loop_footer
      %s14 = sadd.s32 1, %s10
    $region7: #{tpu_custom_call.1} parent=1 // loop_footer_branch
      %9 = sbr.rel target = $region3
    $region8: #{tpu_custom_call.1} parent=1 // loop_exit
      _

</llo_original>
